<compile_context>
chip_gen: v7x
topology: tpu7x:2x2x1
jax: 0.10.0
libtpu: 0.0.40
codegen_flags: <defaults>
</compile_context>

<pallas_src>
import jax
import jax.numpy as jnp
from jax.experimental import pallas as pl
from jax.experimental.pallas import tpu as pltpu


def cw_mul_kernel(p_ref, x_ref, o_ref):
    # p_ref: (Rb, 1) per-row scales; x_ref/o_ref: (Rb, Tw) tiles.
    o_ref[...] = (x_ref[...] * p_ref[...]).astype(o_ref.dtype)


def _largest_divisor_tile(total, base, max_tile):
    """Largest divisor of `total` that is a multiple of `base` and <= max_tile.

    Falls back to the full extent (always a legal block size) when `total` is
    not a multiple of `base`.
    """
    if total % base != 0:
        return total
    best = base
    t = base
    limit = min(total, max_tile)
    while t <= limit:
        if total % t == 0:
            best = t
        t += base
    return best


def channel_wise_multiply(x, param):
    """Equivalent of torch.mul(param.view(1, -1, 1, 1), x) for NCHW x."""
    N, C, H, W = x.shape
    assert param.shape == (C,)

    R = N * C          # rows: one per (batch, channel)
    L = H * W          # flattened spatial axis -> lane dimension

    x2 = x.reshape(R, L)
    # Per-row scale column, in x's dtype so the kernel math stays in x.dtype.
    p_col = jnp.tile(param.astype(x.dtype), N).reshape(R, 1)

    itemsize = jnp.dtype(x.dtype).itemsize
    # Second-minor alignment: 8 rows for 4-byte, 16 for 2-byte, 32 for 1-byte.
    row_base = max(8, 32 // itemsize)

    # Lane tile: multiple of 128, up to 2048 lanes (lane-dense, unmasked stores).
    tw = _largest_divisor_tile(L, 128, 2048)
    # Row tile: target ~2 MiB per x/out buffer (double-buffered input+output
    # stays well under the 16 MiB v5e default scoped VMEM limit).
    target_rows = max(row_base, (2 << 20) // max(1, tw * itemsize))
    rb = _largest_divisor_tile(R, row_base, target_rows)

    grid = (R // rb, L // tw)

    out2 = pl.pallas_call(
        cw_mul_kernel,
        out_shape=jax.ShapeDtypeStruct((R, L), x.dtype),
        grid=grid,
        in_specs=[
            pl.BlockSpec((rb, 1), lambda i, j: (i, 0)),    # param column
            pl.BlockSpec((rb, tw), lambda i, j: (i, j)),   # x tile
        ],
        out_specs=pl.BlockSpec((rb, tw), lambda i, j: (i, j)),
        compiler_params=pltpu.CompilerParams(
            dimension_semantics=("parallel", "parallel"),
            vmem_limit_bytes=32 * 1024 * 1024,
        ),
    )(p_col, x2)

    return out2.reshape(N, C, H, W)


if __name__ == "__main__":
    key = jax.random.PRNGKey(0)
    kx, kp = jax.random.split(key)

    N, C, H, W = 2, 4, 16, 16
    x = jax.random.normal(kx, (N, C, H, W), dtype=jnp.float32)
    # nn.Parameter(torch.FloatTensor(num_channels)); init_value would fill a
    # constant — use deterministic synthetic values here.
    param = jax.random.normal(kp, (C,), dtype=jnp.float32)

    out = channel_wise_multiply(x, param)
    out = jax.block_until_ready(out)

    ref = param.reshape(1, C, 1, 1) * x
    assert out.shape == x.shape and out.dtype == x.dtype
    assert jnp.allclose(out, ref, atol=1e-6, rtol=1e-6), "mismatch vs reference"
    print("KERNEL_OK")
</pallas_src>

<mosaic_0001>
module attributes {stable_mosaic.version = 11 : i64} {
  func.func @cw_mul_kernel(%arg0: i32, %arg1: i32, %arg2: memref<8x1xf32, #tpu.memory_space<vmem>>, %arg3: memref<8x256xf32, #tpu.memory_space<vmem>>, %arg4: memref<8x256xf32, #tpu.memory_space<vmem>>) attributes {dimension_semantics = [#tpu.dimension_semantics<parallel>, #tpu.dimension_semantics<parallel>], iteration_bounds = array<i64: 1, 1>, scalar_prefetch = 0 : i64, scratch_operands = 0 : i64, tpu.core_type = #tpu.core_type<tc>, window_params = [{transform_indices = @transform_0, window_bounds = array<i64: 8, 1>}, {transform_indices = @transform_1, window_bounds = array<i64: 8, 256>}, {transform_indices = @transform_2, window_bounds = array<i64: 8, 256>}]} {
    %c0 = arith.constant 0 : index
    %c0_0 = arith.constant 0 : index
    %0 = vector.load %arg3[%c0, %c0_0] : memref<8x256xf32, #tpu.memory_space<vmem>>, vector<8x256xf32>
    %c0_1 = arith.constant 0 : index
    %c0_2 = arith.constant 0 : index
    %1 = vector.load %arg2[%c0_1, %c0_2] : memref<8x1xf32, #tpu.memory_space<vmem>>, vector<8x1xf32>
    %2 = vector.broadcast %1 : vector<8x1xf32> to vector<8x256xf32>
    %3 = arith.mulf %0, %2 : vector<8x256xf32>
    %c0_3 = arith.constant 0 : index
    %c0_4 = arith.constant 0 : index
    %4 = vector.load %arg4[%c0_3, %c0_4] : memref<8x256xf32, #tpu.memory_space<vmem>>, vector<8x256xf32>
    tpu.vector_store %arg4[%c0_3, %c0_4], %3 {strides = array<i32>} : memref<8x256xf32, #tpu.memory_space<vmem>>, vector<8x256xf32>,
    return
  }
  func.func @transform_0(%arg0: i32, %arg1: i32) -> (i32, i32) {
    %c0_i32 = arith.constant 0 : i32
    %c0_i32_0 = arith.constant 0 : i32
    return %arg0, %c0_i32 : i32, i32
  }
  func.func @transform_1(%arg0: i32, %arg1: i32) -> (i32, i32) {
    %c0_i32 = arith.constant 0 : i32
    return %arg0, %arg1 : i32, i32
  }
  func.func @transform_2(%arg0: i32, %arg1: i32) -> (i32, i32) {
    %c0_i32 = arith.constant 0 : i32
    return %arg0, %arg1 : i32, i32
  }
}

</mosaic_0001>

<llo_original>
// kernel: tpu_custom_call.1
$region0: #{tpu_custom_call.1}
  #allocation0 [shape = 'u32[]', space=smem, size = 0x4, offset = 0x4, fixed_abs, tag = 'smem constant byte address 0x4 - core index']
  #allocation1 [shape = 'u32[144,128]{1,0:T(1,128)}', space=vmem, size = 0x12000, scoped, tag = 'internal scratch']
  %s0 = inlined_call_operand.vmem [shape: f32[8,1], index: 0, kind: input, shape index: {}]
  %s1 = inlined_call_operand.hbm [shape: f32[8,256], index: 1, kind: input, shape index: {}]
  %s2 = inlined_call_operand.hbm [shape: f32[8,256], index: 2, kind: output, shape index: {}]
  %s3 = sld [smem:[#allocation0]]
  $region22: #{tpu_custom_call.1} parent=0
    _
  %s5 = ssub.s32 1, %s3
  %s6 = scalar_select 0, %s5, %s3
  $region1: #{tpu_custom_call.1} parent=0
    #allocation2 [shape = 'u8[8192]{0}', space=vmem, size = 0x2000, scoped, tag = 'input window, operand 1, single buffered']
    #allocation3 [shape = 's32[1]{0}', space=sflag, size = 0x4, scoped, tag = 'scoped memory for tpu_custom_call.1']
    #allocation4 [shape = 's32[1]{0}', space=sflag, size = 0x4, scoped, tag = 'scoped memory for tpu_custom_call.1']
    #allocation5 [shape = 'u8[8192]{0}', space=vmem, size = 0x2000, scoped, tag = 'output window, operand 0, single buffered']
    %7 = vsyncpa [#allocation3], 0
    %8 = vsyncpa [#allocation4], 0
    // Predicated region
    $region2: #{tpu_custom_call.1} parent=1 // pred_check
      _
    $region3: #{tpu_custom_call.1} parent=1 // pred_check_branch
      %10 = sbr.rel (0) target = $region5
    $region4: #{tpu_custom_call.1} parent=1 // pred_region
      _
    $region5: #{tpu_custom_call.1} parent=1 // pred_fallthru
      _
    // Predicated region
    $region6: #{tpu_custom_call.1} parent=1 // pred_check
      _
    $region7: #{tpu_custom_call.1} parent=1 // pred_check_branch
      %12 = sbr.rel (0) target = $region9
    $region8: #{tpu_custom_call.1} parent=1 // pred_region
      %s14 = ssub.s32 256, 256
      %15 = vsyncadd [#allocation3], %s14
      %s17 = sshll.u32 [#allocation2], 4
      %s18 = int_to_ptr.vmem [resolvable:$true] %s17
      %20 = dma.hbm_to_vmem [thread:$0]  %s1, 256, %s18, [#allocation3]
    $region9: #{tpu_custom_call.1} parent=1 // pred_fallthru
      _
    // Predicated region
    $region10: #{tpu_custom_call.1} parent=1 // pred_check
      _
    $region11: #{tpu_custom_call.1} parent=1 // pred_check_branch
      %22 = sbr.rel (0) target = $region13
    $region12: #{tpu_custom_call.1} parent=1 // pred_region
      %23 = dma.done [#allocation3], 256
    $region13: #{tpu_custom_call.1} parent=1 // pred_fallthru
      _
    %v24 = vld [vmem:[#allocation2] sm:$0xff]
    %v25 = vld [vmem:[#allocation2 + $0x8] sm:$0xff]
    %v26 = vld [vmem:[%s0] sm:$0xff]
    %28 = vset.pattern.permute.xlu0 0
    %29 = vperm.xlu0 %28, %v26
    %v30 = vpop.permute.xlu0 %29
    %v32 = vmul.f32 %v24, %v30
    %v33 = vmul.f32 %v25, %v30
    %34 = vst [vmem:[#allocation5] sm:$0xff] %v32
    %35 = vst [vmem:[#allocation5 + $0x8] sm:$0xff] %v33
    // Predicated region
    $region14: #{tpu_custom_call.1} parent=1 // pred_check
      _
    $region15: #{tpu_custom_call.1} parent=1 // pred_check_branch
      %37 = sbr.rel (0) target = $region17
    $region16: #{tpu_custom_call.1} parent=1 // pred_region
      %s39 = ssub.s32 256, 256
      %40 = vsyncadd [#allocation4], %s39
      %s42 = sshll.u32 [#allocation5], 4
      %s43 = int_to_ptr.vmem [resolvable:$true] %s42
      %45 = dma.vmem_to_hbm [thread:$0]  %s43, 256, %s2, [#allocation4]
    $region17: #{tpu_custom_call.1} parent=1 // pred_fallthru
      _
    // Predicated region
    $region18: #{tpu_custom_call.1} parent=1 // pred_check
      _
    $region19: #{tpu_custom_call.1} parent=1 // pred_check_branch
      %47 = sbr.rel (0) target = $region21
    $region20: #{tpu_custom_call.1} parent=1 // pred_region
      %48 = dma.done [#allocation4], 256
    $region21: #{tpu_custom_call.1} parent=1 // pred_fallthru
      _
    %49 = vsyncpa [#allocation3], 1
    %50 = vsyncpa [#allocation4], 1

</llo_original>
